<compile_context>
chip_gen: v7x
topology: tpu7x:2x2x1
jax: 0.10.0
libtpu: 0.0.40
codegen_flags: <defaults>
</compile_context>

<pallas_src>
import functools
import math

import jax
import jax.numpy as jnp
from jax.experimental import pallas as pl
from jax.experimental.pallas import tpu as pltpu

LANE = 128                      # TPU vreg lane width -> pad feature / adjacency lane dims
ROW_ALIGN = 16                  # bf16 packed sublanes (16) also covers f32 sublanes (8)
FUSED_VMEM_BUDGET = 40 * 2**20  # conservative cap so the fused path fits v7x's 64 MiB VMEM


def _round_up(v, m):
    return (v + m - 1) // m * m


def _nbytes(shape, dtype):
    return math.prod(shape) * jnp.dtype(dtype).itemsize


def _default_tiles():
    """Tile sizes for the large-graph tiled path: 256 on v6e/v7x MXU, 128 on v5e."""
    try:
        kind = jax.devices()[0].device_kind.lower()
    except Exception:  # pragma: no cover
        kind = ""
    if "v5" in kind:
        return 128, 128, 512
    return 256, 256, 512


# --------------------- fused single-call path (small graphs) -----------------

def _fused_gcn_kernel(*refs, num_layers):
    """All GCN layers + query-row gather fused into one kernel (everything in VMEM).

    refs layout (inputs, then output):
      a_full_ref : (N_pad, N_pad)  bf16   normalized adjacency (all rows)
      a_query_ref: (Q_pad, N_pad)  bf16   adjacency rows of the query nodes
      x_ref      : (N_pad, F0_pad) bf16   padded embedding table
      w_i, b_i   : (Fi_pad, Fo_pad) bf16 / (1, Fo_pad) f32   per layer (per-layer padding)
      o_ref      : (Q_pad, FL_pad) f32    query rows only, lane-dense
    """
    a_full_ref, a_query_ref, x_ref = refs[0], refs[1], refs[2]
    wb_refs = refs[3:3 + 2 * num_layers]
    o_ref = refs[3 + 2 * num_layers]

    x = x_ref[...]                                             # bf16 activation
    for i in range(num_layers):
        last = i == num_layers - 1
        w = wb_refs[2 * i][...]                                # bf16 (Fi_pad, Fo_pad)
        b = wb_refs[2 * i + 1][...]                            # f32  (1, Fo_pad)

        # h = X @ W : bf16 MXU matmul, f32 accumulation.
        h = jnp.dot(x, w, preferred_element_type=jnp.float32)

        # Last layer aggregates only the query rows of A_hat.
        a = a_query_ref[...] if last else a_full_ref[...]
        out = jnp.dot(a, h.astype(jnp.bfloat16),
                      preferred_element_type=jnp.float32) + b  # f32 epilogue (bias)

        if last:
            o_ref[...] = out
        else:
            x = jnp.maximum(out, 0.0).astype(jnp.bfloat16)     # ReLU, back to bf16
        # TODO(synk): nn.Dropout(p=0.5) between layers is identity in eval mode;
        # training-mode dropout is not implemented.


def _fused_bytes_estimate(n, q, feat_dims):
    """Padded VMEM footprint of the fused path (inputs + output + f32 intermediates)."""
    n_pad = _round_up(n, LANE)
    q_pad = _round_up(q, ROW_ALIGN)
    f_pads = [_round_up(f, LANE) for f in feat_dims]
    b = _nbytes((n_pad, n_pad), jnp.bfloat16)          # a_full
    b += _nbytes((q_pad, n_pad), jnp.bfloat16)         # a_query
    b += _nbytes((n_pad, f_pads[0]), jnp.bfloat16)     # x
    for fin, fout in zip(f_pads[:-1], f_pads[1:]):
        b += _nbytes((fin, fout), jnp.bfloat16) + _nbytes((1, fout), jnp.float32)
    b += _nbytes((q_pad, f_pads[-1]), jnp.float32)     # output
    b += 3 * _nbytes((n_pad, max(f_pads)), jnp.float32)  # h / relu intermediates headroom
    return b


def fused_gcn_forward(a_hat, nodes, x0, layers):
    """Whole GCN stack + final query-row gather as one pallas_call."""
    n = a_hat.shape[0]
    q = nodes.shape[0]
    num_layers = len(layers)

    feat_dims = [x0.shape[1]] + [w.shape[1] for w, _ in layers]
    f_pads = [_round_up(f, LANE) for f in feat_dims]     # per-layer lane-aligned widths
    n_pad = _round_up(n, LANE)                           # adjacency lane dim -> 128-aligned
    q_pad = _round_up(q, ROW_ALIGN)

    def pad2(m, rows, cols, dtype):
        r, c = m.shape
        return jnp.pad(m, ((0, rows - r), (0, cols - c))).astype(dtype)

    a_full = pad2(a_hat, n_pad, n_pad, jnp.bfloat16)
    a_query = pad2(a_hat[nodes], q_pad, n_pad, jnp.bfloat16)
    x_p = pad2(x0, n_pad, f_pads[0], jnp.bfloat16)

    args = [a_full, a_query, x_p]
    for (w, b), fin_pad, fout_pad in zip(layers, f_pads[:-1], f_pads[1:]):
        args.append(pad2(w, fin_pad, fout_pad, jnp.bfloat16))
        args.append(pad2(b, 1, fout_pad, jnp.float32))

    out_shape = (q_pad, f_pads[-1])
    args_bytes = sum(_nbytes(a.shape, a.dtype) for a in args)
    out_bytes = _nbytes(out_shape, jnp.float32)
    interm_bytes = 3 * _nbytes((n_pad, max(f_pads)), jnp.float32)
    needed = args_bytes + out_bytes + interm_bytes
    vmem_limit = int(min(max(2 * needed, 8 * 2**20), 64 * 2**20))

    flops = 0
    for i, (fin_pad, fout_pad) in enumerate(zip(f_pads[:-1], f_pads[1:])):
        rows = q_pad if i == num_layers - 1 else n_pad
        flops += 2 * n_pad * fin_pad * fout_pad          # X @ W
        flops += 2 * rows * n_pad * fout_pad             # A @ H

    vmem = pl.BlockSpec(memory_space=pltpu.MemorySpace.VMEM)
    kernel = functools.partial(_fused_gcn_kernel, num_layers=num_layers)
    out_pad = pl.pallas_call(
        kernel,
        out_shape=jax.ShapeDtypeStruct(out_shape, jnp.float32),
        in_specs=[vmem] * len(args),
        out_specs=vmem,
        compiler_params=pltpu.CompilerParams(vmem_limit_bytes=vmem_limit),
        cost_estimate=pl.CostEstimate(
            flops=flops, transcendentals=0,
            bytes_accessed=args_bytes + out_bytes),
    )(*args)

    f_out = layers[-1][0].shape[1]
    return out_pad[:q, :f_out]


# ------------------- tiled per-layer path (large graphs) ---------------------

def _mm_bias_act_kernel(a_ref, b_ref, bias_ref, o_ref, acc_ref, *, relu):
    """One (tm, tn) output tile of act(A @ B + bias), f32 VMEM accumulator over K."""
    @pl.when(pl.program_id(2) == 0)
    def _():
        acc_ref[...] = jnp.zeros_like(acc_ref)

    acc_ref[...] += jnp.dot(a_ref[...], b_ref[...],
                            preferred_element_type=jnp.float32)

    @pl.when(pl.program_id(2) == pl.num_programs(2) - 1)
    def _():
        out = acc_ref[...] + bias_ref[...]
        if relu:
            out = jnp.maximum(out, 0.0)
        o_ref[...] = out.astype(o_ref.dtype)


def tiled_matmul_bias_act(a, b, bias, *, relu, out_dtype, tm, tn, tk):
    """Tiled act(A @ B + bias) with bf16 MXU operands and f32 accumulation."""
    m, k = a.shape
    _, n = b.shape

    if m >= tm:
        m_pad = _round_up(m, tm)
    else:
        m_pad = _round_up(m, ROW_ALIGN)
        tm = m_pad
    if n >= tn:
        n_pad = _round_up(n, tn)
    else:
        n_pad = _round_up(n, LANE)
        tn = n_pad
    if k >= tk:
        k_pad = _round_up(k, tk)
    else:
        k_pad = _round_up(k, LANE)
        tk = k_pad

    a_p = jnp.pad(a, ((0, m_pad - m), (0, k_pad - k))).astype(jnp.bfloat16)
    b_p = jnp.pad(b, ((0, k_pad - k), (0, n_pad - n))).astype(jnp.bfloat16)
    bias_p = jnp.pad(bias, ((0, 0), (0, n_pad - n))).astype(jnp.float32)

    grid = (m_pad // tm, n_pad // tn, k_pad // tk)
    bytes_accessed = (_nbytes(a_p.shape, a_p.dtype) + _nbytes(b_p.shape, b_p.dtype)
                      + _nbytes(bias_p.shape, bias_p.dtype)
                      + _nbytes((m_pad, n_pad), out_dtype))
    vmem_tiles = (2 * (_nbytes((tm, tk), jnp.bfloat16) + _nbytes((tk, tn), jnp.bfloat16)
                       + _nbytes((1, tn), jnp.float32) + _nbytes((tm, tn), out_dtype))
                  + _nbytes((tm, tn), jnp.float32))
    vmem_limit = int(min(max(2 * vmem_tiles, 8 * 2**20), 64 * 2**20))

    kernel = functools.partial(_mm_bias_act_kernel, relu=relu)
    out = pl.pallas_call(
        kernel,
        out_shape=jax.ShapeDtypeStruct((m_pad, n_pad), out_dtype),
        grid_spec=pltpu.PrefetchScalarGridSpec(
            num_scalar_prefetch=0,
            grid=grid,
            in_specs=[pl.BlockSpec((tm, tk), lambda i, j, kk: (i, kk)),
                      pl.BlockSpec((tk, tn), lambda i, j, kk: (kk, j)),
                      pl.BlockSpec((1, tn), lambda i, j, kk: (0, j))],
            out_specs=pl.BlockSpec((tm, tn), lambda i, j, kk: (i, j)),
            scratch_shapes=[pltpu.VMEM((tm, tn), jnp.float32)]),
        compiler_params=pltpu.CompilerParams(
            dimension_semantics=("parallel", "parallel", "arbitrary"),
            vmem_limit_bytes=vmem_limit),
        cost_estimate=pl.CostEstimate(
            flops=2 * m_pad * n_pad * k_pad, transcendentals=0,
            bytes_accessed=bytes_accessed),
    )(a_p, b_p, bias_p)
    return out[:m, :n]


def tiled_gcn_forward(a_hat, nodes, x0, layers, *, tm, tn, tk):
    """Per-layer row/N/K-tiled GCN forward: H = X@W, then out = act(A@H + b)."""
    num_layers = len(layers)
    a_query = a_hat[nodes]
    x = x0
    for i, (w, b) in enumerate(layers):
        last = i == num_layers - 1
        zero_bias = jnp.zeros((1, w.shape[1]), jnp.float32)
        h = tiled_matmul_bias_act(x, w, zero_bias, relu=False,
                                  out_dtype=jnp.bfloat16, tm=tm, tn=tn, tk=tk)
        a = a_query if last else a_hat
        x = tiled_matmul_bias_act(a, h, b, relu=not last,
                                  out_dtype=jnp.float32 if last else jnp.bfloat16,
                                  tm=tm, tn=tn, tk=tk)
    return x


# ------------------------------ dispatch / glue -------------------------------

def gcn_forward(a_hat, nodes, x0, layers, *, force_tiled=False):
    feat_dims = [x0.shape[1]] + [w.shape[1] for w, _ in layers]
    est = _fused_bytes_estimate(a_hat.shape[0], nodes.shape[0], feat_dims)
    if force_tiled or est > FUSED_VMEM_BUDGET:
        tm, tn, tk = _default_tiles()
        return tiled_gcn_forward(a_hat, nodes, x0, layers, tm=tm, tn=tn, tk=tk)
    return fused_gcn_forward(a_hat, nodes, x0, layers)


def build_norm_adj(edge_index, num_nodes):
    """Dense symmetric GCN normalization: D^-1/2 (A + I) D^-1/2.

    edge_index: (2, E) int32, row 0 = source, row 1 = target (PyG convention).
    Duplicate edges are scatter-ADDed, matching PyG GCNConv aggregation + degree."""
    src, dst = edge_index[0], edge_index[1]
    a = jnp.zeros((num_nodes, num_nodes), jnp.float32).at[dst, src].add(1.0)
    a = a + jnp.eye(num_nodes, dtype=jnp.float32)          # add self-loops
    deg = a.sum(axis=1)
    dinv = jnp.where(deg > 0, 1.0 / jnp.sqrt(deg), 0.0)
    return dinv[:, None] * a * dinv[None, :]


def init_params(key, num_nodes, embedding_size, hidden_sizes, num_classes):
    """Deterministic parameter init (embedding table + GCN weights/biases)."""
    sizes = [embedding_size] + list(hidden_sizes) + [num_classes]
    keys = jax.random.split(key, 1 + 2 * (len(sizes) - 1))
    emb = jax.random.normal(keys[0], (num_nodes, embedding_size), jnp.float32) * 0.1
    layers = []
    for i in range(len(sizes) - 1):
        fin, fout = sizes[i], sizes[i + 1]
        scale = jnp.sqrt(6.0 / (fin + fout))               # glorot-uniform, like GCNConv
        w = jax.random.uniform(keys[1 + 2 * i], (fin, fout), jnp.float32,
                               minval=-scale, maxval=scale)
        b = jnp.zeros((1, fout), jnp.float32)
        layers.append((w, b))
    return emb, layers


def ceu_gnn_forward(nodes, edge_index, emb_weight, layers, *, v=None, delta=None,
                    force_tiled=False):
    """Forward pass of CEU_GNN (GCN layers, eval mode)."""
    x = emb_weight
    if v is not None and delta is not None:
        x = x + delta
    a_hat = build_norm_adj(edge_index, emb_weight.shape[0])
    return gcn_forward(a_hat, nodes, x, layers, force_tiled=force_tiled)


# --------------------------------- main ---------------------------------------

if __name__ == "__main__":
    num_nodes = 16
    embedding_size = 32
    hidden_sizes = [32]
    num_classes = 8
    num_edges = 40

    key = jax.random.PRNGKey(0)
    k_param, k_src, k_dst = jax.random.split(key, 3)

    emb_weight, layers = init_params(
        k_param, num_nodes, embedding_size, hidden_sizes, num_classes)

    src = jax.random.randint(k_src, (num_edges,), 0, num_nodes, jnp.int32)
    dst = jax.random.randint(k_dst, (num_edges,), 0, num_nodes, jnp.int32)
    edge_index = jnp.stack([src, dst], axis=0)              # (2, E)

    nodes = jnp.arange(8, dtype=jnp.int32)                  # query nodes

    # Fused single-call path (selected automatically at these small shapes).
    out_fused = jax.block_until_ready(
        ceu_gnn_forward(nodes, edge_index, emb_weight, layers))
    # Tiled per-layer path (forced, exercises the large-graph code path).
    out_tiled = jax.block_until_ready(
        ceu_gnn_forward(nodes, edge_index, emb_weight, layers, force_tiled=True))

    # Pure-JAX f32 reference of the GCN math (kernels use bf16 operands with f32
    # accumulation, so compare with a bf16-appropriate tolerance).
    a_hat = build_norm_adj(edge_index, num_nodes)
    x_ref = emb_weight
    for i, (w, b) in enumerate(layers):
        x_ref = a_hat @ (x_ref @ w) + b
        if i != len(layers) - 1:
            x_ref = jnp.maximum(x_ref, 0.0)
    ref = x_ref[nodes]

    assert out_fused.shape == (nodes.shape[0], num_classes)
    assert out_tiled.shape == (nodes.shape[0], num_classes)
    assert jnp.allclose(out_fused, ref, atol=3e-2, rtol=3e-2), (
        float(jnp.max(jnp.abs(out_fused - ref))))
    assert jnp.allclose(out_tiled, ref, atol=3e-2, rtol=3e-2), (
        float(jnp.max(jnp.abs(out_tiled - ref))))

    print("KERNEL_OK")
</pallas_src>

<mosaic_0001>
module attributes {stable_mosaic.version = 11 : i64} {
  func.func @_fused_gcn_kernel(%arg0: memref<128x128xbf16, #tpu.memory_space<vmem>>, %arg1: memref<16x128xbf16, #tpu.memory_space<vmem>>, %arg2: memref<128x128xbf16, #tpu.memory_space<vmem>>, %arg3: memref<128x128xbf16, #tpu.memory_space<vmem>>, %arg4: memref<1x128xf32, #tpu.memory_space<vmem>>, %arg5: memref<128x128xbf16, #tpu.memory_space<vmem>>, %arg6: memref<1x128xf32, #tpu.memory_space<vmem>>, %arg7: memref<16x128xf32, #tpu.memory_space<vmem>>) attributes {dimension_semantics = [], scalar_prefetch = 0 : i64, scratch_operands = 0 : i64, tpu.core_type = #tpu.core_type<tc>} {
    %c0 = arith.constant 0 : index
    %c0_0 = arith.constant 0 : index
    %0 = vector.load %arg2[%c0, %c0_0] : memref<128x128xbf16, #tpu.memory_space<vmem>>, vector<128x128xbf16>
    %c0_1 = arith.constant 0 : index
    %c0_2 = arith.constant 0 : index
    %1 = vector.load %arg3[%c0_1, %c0_2] : memref<128x128xbf16, #tpu.memory_space<vmem>>, vector<128x128xbf16>
    %c0_3 = arith.constant 0 : index
    %c0_4 = arith.constant 0 : index
    %2 = vector.load %arg4[%c0_3, %c0_4] : memref<1x128xf32, #tpu.memory_space<vmem>>, vector<1x128xf32>
    %cst = arith.constant dense<0.000000e+00> : vector<128x128xf32>
    %3 = tpu.matmul %0, %1, %cst {dimension_numbers = #tpu.dot_dimension_numbers<[1], [0], [0], [1], [0, 0, 1, 1], [], []>} : vector<128x128xbf16>, vector<128x128xbf16>, vector<128x128xf32> -> vector<128x128xf32>
    %c0_5 = arith.constant 0 : index
    %c0_6 = arith.constant 0 : index
    %4 = vector.load %arg0[%c0_5, %c0_6] : memref<128x128xbf16, #tpu.memory_space<vmem>>, vector<128x128xbf16>
    %5 = arith.truncf %3 : vector<128x128xf32> to vector<128x128xbf16>
    %cst_7 = arith.constant dense<0.000000e+00> : vector<128x128xf32>
    %6 = tpu.matmul %4, %5, %cst_7 {dimension_numbers = #tpu.dot_dimension_numbers<[1], [0], [0], [1], [0, 0, 1, 1], [], []>} : vector<128x128xbf16>, vector<128x128xbf16>, vector<128x128xf32> -> vector<128x128xf32>
    %7 = vector.broadcast %2 : vector<1x128xf32> to vector<128x128xf32>
    %8 = arith.addf %6, %7 : vector<128x128xf32>
    %cst_8 = arith.constant 0.000000e+00 : f32
    %9 = vector.broadcast %cst_8 : f32 to vector<128x128xf32>
    %10 = arith.maximumf %8, %9 : vector<128x128xf32>
    %11 = arith.truncf %10 : vector<128x128xf32> to vector<128x128xbf16>
    %c0_9 = arith.constant 0 : index
    %c0_10 = arith.constant 0 : index
    %12 = vector.load %arg5[%c0_9, %c0_10] : memref<128x128xbf16, #tpu.memory_space<vmem>>, vector<128x128xbf16>
    %c0_11 = arith.constant 0 : index
    %c0_12 = arith.constant 0 : index
    %13 = vector.load %arg6[%c0_11, %c0_12] : memref<1x128xf32, #tpu.memory_space<vmem>>, vector<1x128xf32>
    %cst_13 = arith.constant dense<0.000000e+00> : vector<128x128xf32>
    %14 = tpu.matmul %11, %12, %cst_13 {dimension_numbers = #tpu.dot_dimension_numbers<[1], [0], [0], [1], [0, 0, 1, 1], [], []>} : vector<128x128xbf16>, vector<128x128xbf16>, vector<128x128xf32> -> vector<128x128xf32>
    %c0_14 = arith.constant 0 : index
    %c0_15 = arith.constant 0 : index
    %15 = vector.load %arg1[%c0_14, %c0_15] : memref<16x128xbf16, #tpu.memory_space<vmem>>, vector<16x128xbf16>
    %16 = arith.truncf %14 : vector<128x128xf32> to vector<128x128xbf16>
    %cst_16 = arith.constant dense<0.000000e+00> : vector<16x128xf32>
    %17 = tpu.matmul %15, %16, %cst_16 {dimension_numbers = #tpu.dot_dimension_numbers<[1], [0], [0], [1], [0, 0, 1, 1], [], []>} : vector<16x128xbf16>, vector<128x128xbf16>, vector<16x128xf32> -> vector<16x128xf32>
    %18 = vector.broadcast %13 : vector<1x128xf32> to vector<16x128xf32>
    %19 = arith.addf %17, %18 : vector<16x128xf32>
    %c0_17 = arith.constant 0 : index
    %c0_18 = arith.constant 0 : index
    %20 = vector.load %arg7[%c0_17, %c0_18] : memref<16x128xf32, #tpu.memory_space<vmem>>, vector<16x128xf32>
    tpu.vector_store %arg7[%c0_17, %c0_18], %19 {strides = array<i32>} : memref<16x128xf32, #tpu.memory_space<vmem>>, vector<16x128xf32>,
    return
  }
}

</mosaic_0001>

<llo_original>
// kernel: tpu_custom_call.1
$region0: #{tpu_custom_call.1}
  #allocation0 [shape = 'u32[]', space=smem, size = 0x4, offset = 0x4, fixed_abs, tag = 'smem constant byte address 0x4 - core index']
  #allocation1 [shape = 'u32[144,128]{1,0:T(1,128)}', space=vmem, size = 0x12000, scoped, tag = 'internal scratch']
  %s0 = inlined_call_operand.hbm [shape: bf16[128,128], index: 0, kind: input, shape index: {}]
  %s1 = inlined_call_operand.hbm [shape: bf16[16,128], index: 1, kind: input, shape index: {}]
  %s2 = inlined_call_operand.hbm [shape: bf16[128,128], index: 2, kind: input, shape index: {}]
  %s3 = inlined_call_operand.hbm [shape: bf16[128,128], index: 3, kind: input, shape index: {}]
  %s4 = inlined_call_operand.vmem [shape: f32[1,128], index: 4, kind: input, shape index: {}]
  %s5 = inlined_call_operand.hbm [shape: bf16[128,128], index: 5, kind: input, shape index: {}]
  %s6 = inlined_call_operand.vmem [shape: f32[1,128], index: 6, kind: input, shape index: {}]
  %s7 = inlined_call_operand.hbm [shape: f32[16,128], index: 7, kind: output, shape index: {}]
  %s8 = sld [smem:[#allocation0]]
  $region58: #{tpu_custom_call.1} parent=0
    _
  %s10 = ssub.s32 1, %s8
  %s11 = scalar_select 0, %s10, %s8
  $region1: #{tpu_custom_call.1} parent=0
    #allocation2 [shape = 'u8[32768]{0}', space=vmem, size = 0x8000, scoped, tag = 'input window, operand 0, single buffered']
    #allocation3 [shape = 's32[1]{0}', space=sflag, size = 0x4, scoped, tag = 'scoped memory for tpu_custom_call.1']
    #allocation4 [shape = 's32[1]{0}', space=sflag, size = 0x4, scoped, tag = 'scoped memory for tpu_custom_call.1']
    #allocation5 [shape = 'u8[4096]{0}', space=vmem, size = 0x1000, scoped, tag = 'input window, operand 1, single buffered']
    #allocation6 [shape = 's32[1]{0}', space=sflag, size = 0x4, scoped, tag = 'scoped memory for tpu_custom_call.1']
    #allocation7 [shape = 'u8[32768]{0}', space=vmem, size = 0x8000, scoped, tag = 'input window, operand 2, single buffered']
    #allocation8 [shape = 'u8[32768]{0}', space=vmem, size = 0x8000, scoped, tag = 'input window, operand 3, single buffered']
    #allocation9 [shape = 's32[1]{0}', space=sflag, size = 0x4, scoped, tag = 'scoped memory for tpu_custom_call.1']
    #allocation10 [shape = 'u8[32768]{0}', space=vmem, size = 0x8000, scoped, tag = 'input window, operand 5, single buffered']
    #allocation11 [shape = 'u8[8192]{0}', space=vmem, size = 0x2000, scoped, tag = 'output window, operand 0, single buffered']
    %12 = vsyncpa [#allocation3], 0
    %13 = vsyncpa [#allocation6], 0
    %14 = vsyncpa [#allocation9], 0
    %15 = vsyncpa [#allocation4], 0
    // Predicated region
    $region2: #{tpu_custom_call.1} parent=1 // pred_check
      _
    $region3: #{tpu_custom_call.1} parent=1 // pred_check_branch
      %17 = sbr.rel (0) target = $region5
    $region4: #{tpu_custom_call.1} parent=1 // pred_region
      %s19 = ssub.s32 1024, 1024
      %20 = vsyncadd [#allocation3], %s19
      %s21 = sshll.u32 [#allocation2], 4
      %s22 = int_to_ptr.vmem [resolvable:$true] %s21
      %27 = dma.hbm_to_vmem [thread:$0]  %s0, 1024, %s22, [#allocation3], 64, 64, 4
    $region5: #{tpu_custom_call.1} parent=1 // pred_fallthru
      _
    // Predicated region
    $region6: #{tpu_custom_call.1} parent=1 // pred_check
      _
    $region7: #{tpu_custom_call.1} parent=1 // pred_check_branch
      %29 = sbr.rel (0) target = $region9
    $region8: #{tpu_custom_call.1} parent=1 // pred_region
      %s31 = ssub.s32 128, 128
      %32 = vsyncadd [#allocation6], %s31
      %s33 = sshll.u32 [#allocation5], 4
      %s34 = int_to_ptr.vmem [resolvable:$true] %s33
      %39 = dma.hbm_to_vmem [thread:$0]  %s1, 128, %s34, [#allocation6], 64, 64, 4
    $region9: #{tpu_custom_call.1} parent=1 // pred_fallthru
      _
    // Predicated region
    $region10: #{tpu_custom_call.1} parent=1 // pred_check
      _
    $region11: #{tpu_custom_call.1} parent=1 // pred_check_branch
      %41 = sbr.rel (0) target = $region13
    $region12: #{tpu_custom_call.1} parent=1 // pred_region
      %s43 = ssub.s32 1024, 1024
      %44 = vsyncadd [#allocation6], %s43
      %s45 = sshll.u32 [#allocation7], 4
      %s46 = int_to_ptr.vmem [resolvable:$true] %s45
      %51 = dma.hbm_to_vmem [thread:$0]  %s2, 1024, %s46, [#allocation6], 64, 64, 4
    $region13: #{tpu_custom_call.1} parent=1 // pred_fallthru
      _
    // Predicated region
    $region14: #{tpu_custom_call.1} parent=1 // pred_check
      _
    $region15: #{tpu_custom_call.1} parent=1 // pred_check_branch
      %53 = sbr.rel (0) target = $region17
    $region16: #{tpu_custom_call.1} parent=1 // pred_region
      %s55 = ssub.s32 1024, 1024
      %56 = vsyncadd [#allocation9], %s55
      %s57 = sshll.u32 [#allocation8], 4
      %s58 = int_to_ptr.vmem [resolvable:$true] %s57
      %63 = dma.hbm_to_vmem [thread:$0]  %s3, 1024, %s58, [#allocation9], 64, 64, 4
    $region17: #{tpu_custom_call.1} parent=1 // pred_fallthru
      _
    // Predicated region
    $region18: #{tpu_custom_call.1} parent=1 // pred_check
      _
    $region19: #{tpu_custom_call.1} parent=1 // pred_check_branch
      %65 = sbr.rel (0) target = $region21
    $region20: #{tpu_custom_call.1} parent=1 // pred_region
      _
    $region21: #{tpu_custom_call.1} parent=1 // pred_fallthru
      _
    // Predicated region
    $region22: #{tpu_custom_call.1} parent=1 // pred_check
      _
    $region23: #{tpu_custom_call.1} parent=1 // pred_check_branch
      %67 = sbr.rel (0) target = $region25
    $region24: #{tpu_custom_call.1} parent=1 // pred_region
      %s69 = ssub.s32 1024, 1024
      %70 = vsyncadd [#allocation9], %s69
      %s71 = sshll.u32 [#allocation10], 4
      %s72 = int_to_ptr.vmem [resolvable:$true] %s71
      %77 = dma.hbm_to_vmem [thread:$0]  %s5, 1024, %s72, [#allocation9], 64, 64, 4
    $region25: #{tpu_custom_call.1} parent=1 // pred_fallthru
      _
    // Predicated region
    $region26: #{tpu_custom_call.1} parent=1 // pred_check
      _
    $region27: #{tpu_custom_call.1} parent=1 // pred_check_branch
      %79 = sbr.rel (0) target = $region29
    $region28: #{tpu_custom_call.1} parent=1 // pred_region
      _
    $region29: #{tpu_custom_call.1} parent=1 // pred_fallthru
      _
    // Predicated region
    $region30: #{tpu_custom_call.1} parent=1 // pred_check
      _
    $region31: #{tpu_custom_call.1} parent=1 // pred_check_branch
      %81 = sbr.rel (0) target = $region33
    $region32: #{tpu_custom_call.1} parent=1 // pred_region
      %82 = dma.done [#allocation3], 1024
    $region33: #{tpu_custom_call.1} parent=1 // pred_fallthru
      _
    // Predicated region
    $region34: #{tpu_custom_call.1} parent=1 // pred_check
      _
    $region35: #{tpu_custom_call.1} parent=1 // pred_check_branch
      %84 = sbr.rel (0) target = $region37
    $region36: #{tpu_custom_call.1} parent=1 // pred_region
      %85 = dma.done [#allocation6], 128
    $region37: #{tpu_custom_call.1} parent=1 // pred_fallthru
      _
    // Predicated region
    $region38: #{tpu_custom_call.1} parent=1 // pred_check
      _
    $region39: #{tpu_custom_call.1} parent=1 // pred_check_branch
      %87 = sbr.rel (0) target = $region41
    $region40: #{tpu_custom_call.1} parent=1 // pred_region
      %88 = dma.done [#allocation6], 1024
    $region41: #{tpu_custom_call.1} parent=1 // pred_fallthru
      _
    // Predicated region
    $region42: #{tpu_custom_call.1} parent=1 // pred_check
      _
    $region43: #{tpu_custom_call.1} parent=1 // pred_check_branch
      %90 = sbr.rel (0) target = $region45
    $region44: #{tpu_custom_call.1} parent=1 // pred_region
      %91 = dma.done [#allocation9], 1024
    $region45: #{tpu_custom_call.1} parent=1 // pred_fallthru
      _
    // Predicated region
    $region46: #{tpu_custom_call.1} parent=1 // pred_check
      _
    $region47: #{tpu_custom_call.1} parent=1 // pred_check_branch
      %93 = sbr.rel (0) target = $region49
    $region48: #{tpu_custom_call.1} parent=1 // pred_region
      %94 = dma.done [#allocation9], 1024
    $region49: #{tpu_custom_call.1} parent=1 // pred_fallthru
      _
    %v96 = vld [vmem:[#allocation7] sm:$0xf]
    %v97 = vld [vmem:[#allocation7 + $0x4] sm:$0xf]
    %v98 = vld [vmem:[#allocation7 + $0x8] sm:$0xf]
    %v99 = vld [vmem:[#allocation7 + $0xc] sm:$0xf]
    %v100 = vld [vmem:[#allocation7 + $0x10] sm:$0xf]
    %v101 = vld [vmem:[#allocation7 + $0x14] sm:$0xf]
    %v102 = vld [vmem:[#allocation7 + $0x18] sm:$0xf]
    %v103 = vld [vmem:[#allocation7 + $0x1c] sm:$0xf]
    %v104 = vld [vmem:[#allocation7 + $0x20] sm:$0xf]
    %v105 = vld [vmem:[#allocation7 + $0x24] sm:$0xf]
    %v106 = vld [vmem:[#allocation7 + $0x28] sm:$0xf]
    %v107 = vld [vmem:[#allocation7 + $0x2c] sm:$0xf]
    %v108 = vld [vmem:[#allocation7 + $0x30] sm:$0xf]
    %v109 = vld [vmem:[#allocation7 + $0x34] sm:$0xf]
    %v110 = vld [vmem:[#allocation7 + $0x38] sm:$0xf]
    %v111 = vld [vmem:[#allocation7 + $0x3c] sm:$0xf]
    %v112 = vld [vmem:[#allocation8] sm:$0xf]
    %v113 = vld [vmem:[#allocation8 + $0x4] sm:$0xf]
    %v114 = vld [vmem:[#allocation8 + $0x8] sm:$0xf]
    %v115 = vld [vmem:[#allocation8 + $0xc] sm:$0xf]
    %v116 = vld [vmem:[#allocation8 + $0x10] sm:$0xf]
    %v117 = vld [vmem:[#allocation8 + $0x14] sm:$0xf]
    %v118 = vld [vmem:[#allocation8 + $0x18] sm:$0xf]
    %v119 = vld [vmem:[#allocation8 + $0x1c] sm:$0xf]
    %v120 = vld [vmem:[#allocation8 + $0x20] sm:$0xf]
    %v121 = vld [vmem:[#allocation8 + $0x24] sm:$0xf]
    %v122 = vld [vmem:[#allocation8 + $0x28] sm:$0xf]
    %v123 = vld [vmem:[#allocation8 + $0x2c] sm:$0xf]
    %v124 = vld [vmem:[#allocation8 + $0x30] sm:$0xf]
    %v125 = vld [vmem:[#allocation8 + $0x34] sm:$0xf]
    %v126 = vld [vmem:[#allocation8 + $0x38] sm:$0xf]
    %v127 = vld [vmem:[#allocation8 + $0x3c] sm:$0xf]
    %v128 = vld [vmem:[%s4] sm:$0x1]
    %v145 = vunpack.c.l.b16 %v96
    %v146 = vunpack.c.l.b16 %v97
    %v147 = vunpack.c.l.b16 %v98
    %v148 = vunpack.c.l.b16 %v99
    %v149 = vunpack.c.l.b16 %v100
    %v150 = vunpack.c.l.b16 %v101
    %v151 = vunpack.c.l.b16 %v102
    %v152 = vunpack.c.l.b16 %v103
    %v153 = vunpack.c.l.b16 %v104
    %v154 = vunpack.c.l.b16 %v105
    %v155 = vunpack.c.l.b16 %v106
    %v156 = vunpack.c.l.b16 %v107
    %v157 = vunpack.c.l.b16 %v108
    %v158 = vunpack.c.l.b16 %v109
    %v159 = vunpack.c.l.b16 %v110
    %v160 = vunpack.c.l.b16 %v111
    %v161 = vpack.c.b16 %v146, %v145
    %v162 = vpack.c.b16 %v148, %v147
    %v163 = vpack.c.b16 %v150, %v149
    %v164 = vpack.c.b16 %v152, %v151
    %v165 = vpack.c.b16 %v154, %v153
    %v166 = vpack.c.b16 %v156, %v155
    %v167 = vpack.c.b16 %v158, %v157
    %v168 = vpack.c.b16 %v160, %v159
    %v193 = vunpack.c.l.b16 %v112
    %v194 = vunpack.c.l.b16 %v113
    %v195 = vunpack.c.l.b16 %v114
    %v196 = vunpack.c.l.b16 %v115
    %v197 = vunpack.c.l.b16 %v116
    %v198 = vunpack.c.l.b16 %v117
    %v199 = vunpack.c.l.b16 %v118
    %v200 = vunpack.c.l.b16 %v119
    %v201 = vunpack.c.l.b16 %v120
    %v202 = vunpack.c.l.b16 %v121
    %v203 = vunpack.c.l.b16 %v122
    %v204 = vunpack.c.l.b16 %v123
    %v205 = vunpack.c.l.b16 %v124
    %v206 = vunpack.c.l.b16 %v125
    %v207 = vunpack.c.l.b16 %v126
    %v208 = vunpack.c.l.b16 %v127
    %v209 = vpack.c.b16 %v194, %v193
    %v210 = vpack.c.b16 %v196, %v195
    %v211 = vpack.c.b16 %v198, %v197
    %v212 = vpack.c.b16 %v200, %v199
    %v213 = vpack.c.b16 %v202, %v201
    %v214 = vpack.c.b16 %v204, %v203
    %v215 = vpack.c.b16 %v206, %v205
    %v216 = vpack.c.b16 %v208, %v207
    %225 = vmatprep.subr.bf16.mxu0 0
    %226 = vmatpush1.bf16.msra.mxu0 %v209
    %227 = vmatprep.subr.bf16.mxu0 0
    %228 = vmatpush1.bf16.msra.mxu0 %v210
    %229 = vmatprep.subr.bf16.mxu0 0
    %230 = vmatpush1.bf16.msra.mxu0 %v211
    %231 = vmatprep.subr.bf16.mxu0 0
    %232 = vmatpush1.bf16.msra.mxu0 %v212
    %233 = vmatprep.subr.bf16.mxu0 0
    %234 = vmatpush1.bf16.msra.mxu0 %v213
    %235 = vmatprep.subr.bf16.mxu0 0
    %236 = vmatpush1.bf16.msra.mxu0 %v214
    %237 = vmatprep.subr.bf16.mxu0 0
    %238 = vmatpush1.bf16.msra.mxu0 %v215
    %239 = vmatprep.subr.bf16.mxu0 0
    %240 = vmatpush1.bf16.msra.mxu0 %v216
    %241 = vmatprep.subr.bf16.mxu0 0
    %242 = vmatpush1.bf16.msra.mxu0 0
    %243 = vmatprep.subr.bf16.mxu0 0
    %244 = vmatpush1.bf16.msra.mxu0 0
    %245 = vmatprep.subr.bf16.mxu0 0
    %246 = vmatpush1.bf16.msra.mxu0 0
    %247 = vmatprep.subr.bf16.mxu0 0
    %248 = vmatpush1.bf16.msra.mxu0 0
    %249 = vmatprep.subr.bf16.mxu0 0
    %250 = vmatpush1.bf16.msra.mxu0 0
    %251 = vmatprep.subr.bf16.mxu0 0
    %252 = vmatpush1.bf16.msra.mxu0 0
    %253 = vmatprep.subr.bf16.mxu0 0
    %254 = vmatpush1.bf16.msra.mxu0 0
    %255 = vmatprep.subr.bf16.mxu0 0
    %256 = vmatpush1.bf16.msra.mxu0 0
    %257 = vmatprep.mubr.bf16.mxu0 0
    %258 = vmatmul.mubr.bf16.gmra.mrb[0].mxu0 %v161
    %v259 = vpop.f32.mrb[0].mxu0
    %v260 = vadd.f32 0.0, %v259
    %v261 = vpop.f32.mrb[0].mxu0
    %v262 = vpop.f32.mrb[0].mxu0
    %v263 = vadd.f32 0.0, %v262
    %v264 = vpop.f32.mrb[0].mxu0
    %265 = vmatprep.mubr.bf16.mxu0 0
    %266 = vmatmul.mubr.bf16.gmra.mrb[0].mxu0 %v162
    %v267 = vpop.f32.mrb[0].mxu0
    %v268 = vadd.f32 0.0, %v267
    %v269 = vpop.f32.mrb[0].mxu0
    %v270 = vpop.f32.mrb[0].mxu0
    %v271 = vadd.f32 0.0, %v270
    %v272 = vpop.f32.mrb[0].mxu0
    %273 = vmatprep.mubr.bf16.mxu0 0
    %274 = vmatmul.mubr.bf16.gmra.mrb[0].mxu0 %v163
    %v275 = vpop.f32.mrb[0].mxu0
    %v276 = vadd.f32 0.0, %v275
    %v277 = vpop.f32.mrb[0].mxu0
    %v278 = vpop.f32.mrb[0].mxu0
    %v279 = vadd.f32 0.0, %v278
    %v280 = vpop.f32.mrb[0].mxu0
    %281 = vmatprep.mubr.bf16.mxu0 0
    %282 = vmatmul.mubr.bf16.gmra.mrb[0].mxu0 %v164
    %v283 = vpop.f32.mrb[0].mxu0
    %v284 = vadd.f32 0.0, %v283
    %v285 = vpop.f32.mrb[0].mxu0
    %v286 = vpop.f32.mrb[0].mxu0
    %v287 = vadd.f32 0.0, %v286
    %v288 = vpop.f32.mrb[0].mxu0
    %289 = vmatprep.mubr.bf16.mxu0 0
    %290 = vmatmul.mubr.bf16.gmra.mrb[0].mxu0 %v165
    %v291 = vpop.f32.mrb[0].mxu0
    %v292 = vadd.f32 0.0, %v291
    %v293 = vpop.f32.mrb[0].mxu0
    %v294 = vpop.f32.mrb[0].mxu0
    %v295 = vadd.f32 0.0, %v294
    %v296 = vpop.f32.mrb[0].mxu0
    %297 = vmatprep.mubr.bf16.mxu0 0
    %298 = vmatmul.mubr.bf16.gmra.mrb[0].mxu0 %v166
    %v299 = vpop.f32.mrb[0].mxu0
    %v300 = vadd.f32 0.0, %v299
    %v301 = vpop.f32.mrb[0].mxu0
    %v302 = vpop.f32.mrb[0].mxu0
    %v303 = vadd.f32 0.0, %v302
    %v304 = vpop.f32.mrb[0].mxu0
    %305 = vmatprep.mubr.bf16.mxu0 0
    %306 = vmatmul.mubr.bf16.gmra.mrb[0].mxu0 %v167
    %v307 = vpop.f32.mrb[0].mxu0
    %v308 = vadd.f32 0.0, %v307
    %v309 = vpop.f32.mrb[0].mxu0
    %v310 = vpop.f32.mrb[0].mxu0
    %v311 = vadd.f32 0.0, %v310
    %v312 = vpop.f32.mrb[0].mxu0
    %313 = vmatprep.mubr.bf16.mxu0 0
    %314 = vmatmul.mubr.bf16.gmra.mrb[0].mxu0 %v168
    %v315 = vpop.f32.mrb[0].mxu0
    %v316 = vadd.f32 0.0, %v315
    %v317 = vpop.f32.mrb[0].mxu0
    %v318 = vpop.f32.mrb[0].mxu0
    %v319 = vadd.f32 0.0, %v318
    %v320 = vpop.f32.mrb[0].mxu0
    %321 = vdwg.mxu0
    %v322 = vld [vmem:[#allocation2] sm:$0xf]
    %v323 = vld [vmem:[#allocation2 + $0x4] sm:$0xf]
    %v324 = vld [vmem:[#allocation2 + $0x8] sm:$0xf]
    %v325 = vld [vmem:[#allocation2 + $0xc] sm:$0xf]
    %v326 = vld [vmem:[#allocation2 + $0x10] sm:$0xf]
    %v327 = vld [vmem:[#allocation2 + $0x14] sm:$0xf]
    %v328 = vld [vmem:[#allocation2 + $0x18] sm:$0xf]
    %v329 = vld [vmem:[#allocation2 + $0x1c] sm:$0xf]
    %v330 = vld [vmem:[#allocation2 + $0x20] sm:$0xf]
    %v331 = vld [vmem:[#allocation2 + $0x24] sm:$0xf]
    %v332 = vld [vmem:[#allocation2 + $0x28] sm:$0xf]
    %v333 = vld [vmem:[#allocation2 + $0x2c] sm:$0xf]
    %v334 = vld [vmem:[#allocation2 + $0x30] sm:$0xf]
    %v335 = vld [vmem:[#allocation2 + $0x34] sm:$0xf]
    %v336 = vld [vmem:[#allocation2 + $0x38] sm:$0xf]
    %v337 = vld [vmem:[#allocation2 + $0x3c] sm:$0xf]
    %v338 = vpack.c.bf16 %v263, %v260
    %v339 = vpack.c.bf16 %v271, %v268
    %v340 = vpack.c.bf16 %v279, %v276
    %v341 = vpack.c.bf16 %v287, %v284
    %v342 = vpack.c.bf16 %v295, %v292
    %v343 = vpack.c.bf16 %v303, %v300
    %v344 = vpack.c.bf16 %v311, %v308
    %v345 = vpack.c.bf16 %v319, %v316
    %v347 = vlaneseq
    %v348 = vshrl.u32 %v347, 7
    %v349 = vsub.s32 0, %v348
    %v350 = vrot.slane %v128, %v349
    %v368 = vunpack.c.l.b16 %v322
    %v369 = vunpack.c.l.b16 %v323
    %v370 = vunpack.c.l.b16 %v324
    %v371 = vunpack.c.l.b16 %v325
    %v372 = vunpack.c.l.b16 %v326
    %v373 = vunpack.c.l.b16 %v327
    %v374 = vunpack.c.l.b16 %v328
    %v375 = vunpack.c.l.b16 %v329
    %v376 = vunpack.c.l.b16 %v330
    %v377 = vunpack.c.l.b16 %v331
    %v378 = vunpack.c.l.b16 %v332
    %v379 = vunpack.c.l.b16 %v333
    %v380 = vunpack.c.l.b16 %v334
    %v381 = vunpack.c.l.b16 %v335
    %v382 = vunpack.c.l.b16 %v336
    %v383 = vunpack.c.l.b16 %v337
    %v384 = vpack.c.b16 %v369, %v368
    %v385 = vpack.c.b16 %v371, %v370
    %v386 = vpack.c.b16 %v373, %v372
    %v387 = vpack.c.b16 %v375, %v374
    %v388 = vpack.c.b16 %v377, %v376
    %v389 = vpack.c.b16 %v379, %v378
    %v390 = vpack.c.b16 %v381, %v380
    %v391 = vpack.c.b16 %v383, %v382
    %400 = vmatprep.subr.bf16.mxu0 0
    %401 = vmatpush1.bf16.msra.mxu0 %v338
    %402 = vmatprep.subr.bf16.mxu0 0
    %403 = vmatpush1.bf16.msra.mxu0 %v339
    %404 = vmatprep.subr.bf16.mxu0 0
    %405 = vmatpush1.bf16.msra.mxu0 %v340
    %406 = vmatprep.subr.bf16.mxu0 0
    %407 = vmatpush1.bf16.msra.mxu0 %v341
    %408 = vmatprep.subr.bf16.mxu0 0
    %409 = vmatpush1.bf16.msra.mxu0 %v342
    %410 = vmatprep.subr.bf16.mxu0 0
    %411 = vmatpush1.bf16.msra.mxu0 %v343
    %412 = vmatprep.subr.bf16.mxu0 0
    %413 = vmatpush1.bf16.msra.mxu0 %v344
    %414 = vmatprep.subr.bf16.mxu0 0
    %415 = vmatpush1.bf16.msra.mxu0 %v345
    %416 = vmatprep.subr.bf16.mxu0 0
    %417 = vmatpush1.bf16.msra.mxu0 0
    %418 = vmatprep.subr.bf16.mxu0 0
    %419 = vmatpush1.bf16.msra.mxu0 0
    %420 = vmatprep.subr.bf16.mxu0 0
    %421 = vmatpush1.bf16.msra.mxu0 0
    %422 = vmatprep.subr.bf16.mxu0 0
    %423 = vmatpush1.bf16.msra.mxu0 0
    %424 = vmatprep.subr.bf16.mxu0 0
    %425 = vmatpush1.bf16.msra.mxu0 0
    %426 = vmatprep.subr.bf16.mxu0 0
    %427 = vmatpush1.bf16.msra.mxu0 0
    %428 = vmatprep.subr.bf16.mxu0 0
    %429 = vmatpush1.bf16.msra.mxu0 0
    %430 = vmatprep.subr.bf16.mxu0 0
    %431 = vmatpush1.bf16.msra.mxu0 0
    %432 = vmatprep.mubr.bf16.mxu0 0
    %433 = vmatmul.mubr.bf16.gmra.mrb[0].mxu0 %v384
    %v434 = vpop.f32.mrb[0].mxu0
    %v435 = vadd.f32 %v350, %v434
    %v436 = vpop.f32.mrb[0].mxu0
    %v437 = vpop.f32.mrb[0].mxu0
    %v438 = vadd.f32 %v350, %v437
    %v439 = vpop.f32.mrb[0].mxu0
    %440 = vmatprep.mubr.bf16.mxu0 0
    %441 = vmatmul.mubr.bf16.gmra.mrb[0].mxu0 %v385
    %v442 = vpop.f32.mrb[0].mxu0
    %v443 = vadd.f32 %v350, %v442
    %v444 = vpop.f32.mrb[0].mxu0
    %v445 = vpop.f32.mrb[0].mxu0
    %v446 = vadd.f32 %v350, %v445
    %v447 = vpop.f32.mrb[0].mxu0
    %448 = vmatprep.mubr.bf16.mxu0 0
    %449 = vmatmul.mubr.bf16.gmra.mrb[0].mxu0 %v386
    %v450 = vpop.f32.mrb[0].mxu0
    %v451 = vadd.f32 %v350, %v450
    %v452 = vpop.f32.mrb[0].mxu0
    %v453 = vpop.f32.mrb[0].mxu0
    %v454 = vadd.f32 %v350, %v453
    %v455 = vpop.f32.mrb[0].mxu0
    %456 = vmatprep.mubr.bf16.mxu0 0
    %457 = vmatmul.mubr.bf16.gmra.mrb[0].mxu0 %v387
    %v458 = vpop.f32.mrb[0].mxu0
    %v459 = vadd.f32 %v350, %v458
    %v460 = vpop.f32.mrb[0].mxu0
    %v461 = vpop.f32.mrb[0].mxu0
    %v462 = vadd.f32 %v350, %v461
    %v463 = vpop.f32.mrb[0].mxu0
    %464 = vmatprep.mubr.bf16.mxu0 0
    %465 = vmatmul.mubr.bf16.gmra.mrb[0].mxu0 %v388
    %v466 = vpop.f32.mrb[0].mxu0
    %v467 = vadd.f32 %v350, %v466
    %v468 = vpop.f32.mrb[0].mxu0
    %v469 = vpop.f32.mrb[0].mxu0
    %v470 = vadd.f32 %v350, %v469
    %v471 = vpop.f32.mrb[0].mxu0
    %472 = vmatprep.mubr.bf16.mxu0 0
    %473 = vmatmul.mubr.bf16.gmra.mrb[0].mxu0 %v389
    %v474 = vpop.f32.mrb[0].mxu0
    %v475 = vadd.f32 %v350, %v474
    %v476 = vpop.f32.mrb[0].mxu0
    %v477 = vpop.f32.mrb[0].mxu0
    %v478 = vadd.f32 %v350, %v477
    %v479 = vpop.f32.mrb[0].mxu0
    %480 = vmatprep.mubr.bf16.mxu0 0
    %481 = vmatmul.mubr.bf16.gmra.mrb[0].mxu0 %v390
    %v482 = vpop.f32.mrb[0].mxu0
    %v483 = vadd.f32 %v350, %v482
    %v484 = vpop.f32.mrb[0].mxu0
    %v485 = vpop.f32.mrb[0].mxu0
    %v486 = vadd.f32 %v350, %v485
    %v487 = vpop.f32.mrb[0].mxu0
    %488 = vmatprep.mubr.bf16.mxu0 0
    %489 = vmatmul.mubr.bf16.gmra.mrb[0].mxu0 %v391
    %v490 = vpop.f32.mrb[0].mxu0
    %v491 = vadd.f32 %v350, %v490
    %v492 = vpop.f32.mrb[0].mxu0
    %v493 = vpop.f32.mrb[0].mxu0
    %v494 = vadd.f32 %v350, %v493
    %v495 = vpop.f32.mrb[0].mxu0
    %496 = vdwg.mxu0
    %v497 = vmax.f32 %v435, 0.0
    %v498 = vmax.f32 %v438, 0.0
    %v499 = vmax.f32 %v443, 0.0
    %v500 = vmax.f32 %v446, 0.0
    %v501 = vmax.f32 %v451, 0.0
    %v502 = vmax.f32 %v454, 0.0
    %v503 = vmax.f32 %v459, 0.0
    %v504 = vmax.f32 %v462, 0.0
    %v505 = vmax.f32 %v467, 0.0
    %v506 = vmax.f32 %v470, 0.0
    %v507 = vmax.f32 %v475, 0.0
    %v508 = vmax.f32 %v478, 0.0
    %v509 = vmax.f32 %v483, 0.0
    %v510 = vmax.f32 %v486, 0.0
    %v511 = vmax.f32 %v491, 0.0
    %v512 = vmax.f32 %v494, 0.0
    %v513 = vpack.c.bf16 %v498, %v497
    %v514 = vpack.c.bf16 %v500, %v499
    %v515 = vpack.c.bf16 %v502, %v501
    %v516 = vpack.c.bf16 %v504, %v503
    %v517 = vpack.c.bf16 %v506, %v505
    %v518 = vpack.c.bf16 %v508, %v507
    %v519 = vpack.c.bf16 %v510, %v509
    %v520 = vpack.c.bf16 %v512, %v511
    %v521 = vld [vmem:[#allocation10] sm:$0xf]
    %v522 = vld [vmem:[#allocation10 + $0x4] sm:$0xf]
    %v523 = vld [vmem:[#allocation10 + $0x8] sm:$0xf]
    %v524 = vld [vmem:[#allocation10 + $0xc] sm:$0xf]
    %v525 = vld [vmem:[#allocation10 + $0x10] sm:$0xf]
    %v526 = vld [vmem:[#allocation10 + $0x14] sm:$0xf]
    %v527 = vld [vmem:[#allocation10 + $0x18] sm:$0xf]
    %v528 = vld [vmem:[#allocation10 + $0x1c] sm:$0xf]
    %v529 = vld [vmem:[#allocation10 + $0x20] sm:$0xf]
    %v530 = vld [vmem:[#allocation10 + $0x24] sm:$0xf]
    %v531 = vld [vmem:[#allocation10 + $0x28] sm:$0xf]
    %v532 = vld [vmem:[#allocation10 + $0x2c] sm:$0xf]
    %v533 = vld [vmem:[#allocation10 + $0x30] sm:$0xf]
    %v534 = vld [vmem:[#allocation10 + $0x34] sm:$0xf]
    %v535 = vld [vmem:[#allocation10 + $0x38] sm:$0xf]
    %v536 = vld [vmem:[#allocation10 + $0x3c] sm:$0xf]
    %v537 = vld [vmem:[%s6] sm:$0x1]
    %v554 = vunpack.c.l.b16 %v521
    %v555 = vunpack.c.l.b16 %v522
    %v556 = vunpack.c.l.b16 %v523
    %v557 = vunpack.c.l.b16 %v524
    %v558 = vunpack.c.l.b16 %v525
    %v559 = vunpack.c.l.b16 %v526
    %v560 = vunpack.c.l.b16 %v527
    %v561 = vunpack.c.l.b16 %v528
    %v562 = vunpack.c.l.b16 %v529
    %v563 = vunpack.c.l.b16 %v530
    %v564 = vunpack.c.l.b16 %v531
    %v565 = vunpack.c.l.b16 %v532
    %v566 = vunpack.c.l.b16 %v533
    %v567 = vunpack.c.l.b16 %v534
    %v568 = vunpack.c.l.b16 %v535
    %v569 = vunpack.c.l.b16 %v536
    %v570 = vpack.c.b16 %v555, %v554
    %v571 = vpack.c.b16 %v557, %v556
    %v572 = vpack.c.b16 %v559, %v558
    %v573 = vpack.c.b16 %v561, %v560
    %v574 = vpack.c.b16 %v563, %v562
    %v575 = vpack.c.b16 %v565, %v564
    %v576 = vpack.c.b16 %v567, %v566
    %v577 = vpack.c.b16 %v569, %v568
    %586 = vmatprep.subr.bf16.mxu0 0
    %587 = vmatpush1.bf16.msra.mxu0 %v570
    %588 = vmatprep.subr.bf16.mxu0 0
    %589 = vmatpush1.bf16.msra.mxu0 %v571
    %590 = vmatprep.subr.bf16.mxu0 0
    %591 = vmatpush1.bf16.msra.mxu0 %v572
    %592 = vmatprep.subr.bf16.mxu0 0
    %593 = vmatpush1.bf16.msra.mxu0 %v573
    %594 = vmatprep.subr.bf16.mxu0 0
    %595 = vmatpush1.bf16.msra.mxu0 %v574
    %596 = vmatprep.subr.bf16.mxu0 0
    %597 = vmatpush1.bf16.msra.mxu0 %v575
    %598 = vmatprep.subr.bf16.mxu0 0
    %599 = vmatpush1.bf16.msra.mxu0 %v576
    %600 = vmatprep.subr.bf16.mxu0 0
    %601 = vmatpush1.bf16.msra.mxu0 %v577
    %602 = vmatprep.subr.bf16.mxu0 0
    %603 = vmatpush1.bf16.msra.mxu0 0
    %604 = vmatprep.subr.bf16.mxu0 0
    %605 = vmatpush1.bf16.msra.mxu0 0
    %606 = vmatprep.subr.bf16.mxu0 0
    %607 = vmatpush1.bf16.msra.mxu0 0
    %608 = vmatprep.subr.bf16.mxu0 0
    %609 = vmatpush1.bf16.msra.mxu0 0
    %610 = vmatprep.subr.bf16.mxu0 0
    %611 = vmatpush1.bf16.msra.mxu0 0
    %612 = vmatprep.subr.bf16.mxu0 0
    %613 = vmatpush1.bf16.msra.mxu0 0
    %614 = vmatprep.subr.bf16.mxu0 0
    %615 = vmatpush1.bf16.msra.mxu0 0
    %616 = vmatprep.subr.bf16.mxu0 0
    %617 = vmatpush1.bf16.msra.mxu0 0
    %618 = vmatprep.mubr.bf16.mxu0 0
    %619 = vmatmul.mubr.bf16.gmra.mrb[0].mxu0 %v513
    %v620 = vpop.f32.mrb[0].mxu0
    %v621 = vadd.f32 0.0, %v620
    %v622 = vpop.f32.mrb[0].mxu0
    %v623 = vpop.f32.mrb[0].mxu0
    %v624 = vadd.f32 0.0, %v623
    %v625 = vpop.f32.mrb[0].mxu0
    %626 = vmatprep.mubr.bf16.mxu0 0
    %627 = vmatmul.mubr.bf16.gmra.mrb[0].mxu0 %v514
    %v628 = vpop.f32.mrb[0].mxu0
    %v629 = vadd.f32 0.0, %v628
    %v630 = vpop.f32.mrb[0].mxu0
    %v631 = vpop.f32.mrb[0].mxu0
    %v632 = vadd.f32 0.0, %v631
    %v633 = vpop.f32.mrb[0].mxu0
    %634 = vmatprep.mubr.bf16.mxu0 0
    %635 = vmatmul.mubr.bf16.gmra.mrb[0].mxu0 %v515
    %v636 = vpop.f32.mrb[0].mxu0
    %v637 = vadd.f32 0.0, %v636
    %v638 = vpop.f32.mrb[0].mxu0
    %v639 = vpop.f32.mrb[0].mxu0
    %v640 = vadd.f32 0.0, %v639
    %v641 = vpop.f32.mrb[0].mxu0
    %642 = vmatprep.mubr.bf16.mxu0 0
    %643 = vmatmul.mubr.bf16.gmra.mrb[0].mxu0 %v516
    %v644 = vpop.f32.mrb[0].mxu0
    %v645 = vadd.f32 0.0, %v644
    %v646 = vpop.f32.mrb[0].mxu0
    %v647 = vpop.f32.mrb[0].mxu0
    %v648 = vadd.f32 0.0, %v647
    %v649 = vpop.f32.mrb[0].mxu0
    %650 = vmatprep.mubr.bf16.mxu0 0
    %651 = vmatmul.mubr.bf16.gmra.mrb[0].mxu0 %v517
    %v652 = vpop.f32.mrb[0].mxu0
    %v653 = vadd.f32 0.0, %v652
    %v654 = vpop.f32.mrb[0].mxu0
    %v655 = vpop.f32.mrb[0].mxu0
    %v656 = vadd.f32 0.0, %v655
    %v657 = vpop.f32.mrb[0].mxu0
    %658 = vmatprep.mubr.bf16.mxu0 0
    %659 = vmatmul.mubr.bf16.gmra.mrb[0].mxu0 %v518
    %v660 = vpop.f32.mrb[0].mxu0
    %v661 = vadd.f32 0.0, %v660
    %v662 = vpop.f32.mrb[0].mxu0
    %v663 = vpop.f32.mrb[0].mxu0
    %v664 = vadd.f32 0.0, %v663
    %v665 = vpop.f32.mrb[0].mxu0
    %666 = vmatprep.mubr.bf16.mxu0 0
    %667 = vmatmul.mubr.bf16.gmra.mrb[0].mxu0 %v519
    %v668 = vpop.f32.mrb[0].mxu0
    %v669 = vadd.f32 0.0, %v668
    %v670 = vpop.f32.mrb[0].mxu0
    %v671 = vpop.f32.mrb[0].mxu0
    %v672 = vadd.f32 0.0, %v671
    %v673 = vpop.f32.mrb[0].mxu0
    %674 = vmatprep.mubr.bf16.mxu0 0
    %675 = vmatmul.mubr.bf16.gmra.mrb[0].mxu0 %v520
    %v676 = vpop.f32.mrb[0].mxu0
    %v677 = vadd.f32 0.0, %v676
    %v678 = vpop.f32.mrb[0].mxu0
    %v679 = vpop.f32.mrb[0].mxu0
    %v680 = vadd.f32 0.0, %v679
    %v681 = vpop.f32.mrb[0].mxu0
    %682 = vdwg.mxu0
    %v683 = vld [vmem:[#allocation5] sm:$0xf]
    %v684 = vld [vmem:[#allocation5 + $0x4] sm:$0xf]
    %v685 = vpack.c.bf16 %v624, %v621
    %v686 = vpack.c.bf16 %v632, %v629
    %v687 = vpack.c.bf16 %v640, %v637
    %v688 = vpack.c.bf16 %v648, %v645
    %v689 = vpack.c.bf16 %v656, %v653
    %v690 = vpack.c.bf16 %v664, %v661
    %v691 = vpack.c.bf16 %v672, %v669
    %v692 = vpack.c.bf16 %v680, %v677
    %v694 = vlaneseq
    %v695 = vshrl.u32 %v694, 7
    %v696 = vsub.s32 0, %v695
    %v697 = vrot.slane %v537, %v696
    %v701 = vunpack.c.l.b16 %v683
    %v702 = vunpack.c.l.b16 %v684
    %v703 = vpack.c.b16 %v702, %v701
    %705 = vmatprep.subr.bf16.mxu0 0
    %706 = vmatpush1.bf16.msra.mxu0 %v685
    %707 = vmatprep.subr.bf16.mxu0 0
    %708 = vmatpush1.bf16.msra.mxu0 %v686
    %709 = vmatprep.subr.bf16.mxu0 0
    %710 = vmatpush1.bf16.msra.mxu0 %v687
    %711 = vmatprep.subr.bf16.mxu0 0
    %712 = vmatpush1.bf16.msra.mxu0 %v688
    %713 = vmatprep.subr.bf16.mxu0 0
    %714 = vmatpush1.bf16.msra.mxu0 %v689
    %715 = vmatprep.subr.bf16.mxu0 0
    %716 = vmatpush1.bf16.msra.mxu0 %v690
    %717 = vmatprep.subr.bf16.mxu0 0
    %718 = vmatpush1.bf16.msra.mxu0 %v691
    %719 = vmatprep.subr.bf16.mxu0 0
    %720 = vmatpush1.bf16.msra.mxu0 %v692
    %721 = vmatprep.subr.bf16.mxu0 0
    %722 = vmatpush1.bf16.msra.mxu0 0
    %723 = vmatprep.subr.bf16.mxu0 0
    %724 = vmatpush1.bf16.msra.mxu0 0
    %725 = vmatprep.subr.bf16.mxu0 0
    %726 = vmatpush1.bf16.msra.mxu0 0
    %727 = vmatprep.subr.bf16.mxu0 0
    %728 = vmatpush1.bf16.msra.mxu0 0
    %729 = vmatprep.subr.bf16.mxu0 0
    %730 = vmatpush1.bf16.msra.mxu0 0
    %731 = vmatprep.subr.bf16.mxu0 0
    %732 = vmatpush1.bf16.msra.mxu0 0
    %733 = vmatprep.subr.bf16.mxu0 0
    %734 = vmatpush1.bf16.msra.mxu0 0
    %735 = vmatprep.subr.bf16.mxu0 0
    %736 = vmatpush1.bf16.msra.mxu0 0
    %737 = vmatprep.mubr.bf16.mxu0 0
    %738 = vmatmul.mubr.bf16.gmra.mrb[0].mxu0 %v703
    %v739 = vpop.f32.mrb[0].mxu0
    %v740 = vadd.f32 %v697, %v739
    %v741 = vpop.f32.mrb[0].mxu0
    %v742 = vpop.f32.mrb[0].mxu0
    %v743 = vadd.f32 %v697, %v742
    %v744 = vpop.f32.mrb[0].mxu0
    %745 = vdwg.mxu0
    %746 = vst [vmem:[#allocation11] sm:$0xff] %v740
    %747 = vst [vmem:[#allocation11 + $0x8] sm:$0xff] %v743
    // Predicated region
    $region50: #{tpu_custom_call.1} parent=1 // pred_check
      _
    $region51: #{tpu_custom_call.1} parent=1 // pred_check_branch
      %749 = sbr.rel (0) target = $region53
    $region52: #{tpu_custom_call.1} parent=1 // pred_region
      %s751 = ssub.s32 256, 256
      %752 = vsyncadd [#allocation4], %s751
      %s753 = sshll.u32 [#allocation11], 4
      %s754 = int_to_ptr.vmem [resolvable:$true] %s753
      %759 = dma.vmem_to_hbm [thread:$0]  %s754, 256, %s7, [#allocation4], 128, 128, 8
    $region53: #{tpu_custom_call.1} parent=1 // pred_fallthru
      _
    // Predicated region
    $region54: #{tpu_custom_call.1} parent=1 // pred_check
      _
    $region55: #{tpu_custom_call.1} parent=1 // pred_check_branch
      %761 = sbr.rel (0) target = $region57
    $region56: #{tpu_custom_call.1} parent=1 // pred_region
      %762 = dma.done [#allocation4], 256
    $region57: #{tpu_custom_call.1} parent=1 // pred_fallthru
      _
    %763 = vsyncpa [#allocation3], 1
    %764 = vsyncpa [#allocation6], 1
    %765 = vsyncpa [#allocation9], 1
    %766 = vsyncpa [#allocation4], 1

</llo_original>
